<compile_context>
chip_gen: v6e
topology: v6e:2x2x1
jax: 0.10.0
libtpu: 0.0.40
codegen_flags: <defaults>
</compile_context>

<pallas_src>
import functools
import math

import jax
import jax.numpy as jnp
from jax.experimental import pallas as pl
from jax.experimental.pallas import tpu as pltpu


def _mbstd_kernel(x_ref, std_ref, *, alpha):
    """Minibatch-stddev scalar: mean over features of sqrt(batch variance + alpha).

    x_ref:  (N, C*H*W) f32 in VMEM (whole tensor, one block)
    std_ref: (1,) f32 in SMEM
    """
    n = x_ref.shape[0]
    rows = [x_ref[i:i + 1, :] for i in range(n)]        # each (1, M)
    mu = rows[0]
    for r in rows[1:]:
        mu = mu + r
    mu = mu * (1.0 / n)
    var = (rows[0] - mu) * (rows[0] - mu)
    for r in rows[1:]:
        var = var + (r - mu) * (r - mu)
    var = var * (1.0 / n)
    std_ref[0] = jnp.mean(jnp.sqrt(var + alpha))


def _dis_final_kernel(x_ref, std_ref, w1_ref, b1_ref, w2_ref, b2_ref,
                      w3_ref, b3_ref, o_ref, xpad1_ref, xpad2_ref):
    """Fused conv_1(3x3,p1)+LReLU -> conv_2(4x4,p1, stride-1 form)+LReLU -> conv_3(1x1)
    for ONE batch image, channels-first, pure VPU FMAs with SMEM scalar weights.

    x_ref     : (C, H, W)        VMEM  input image (batch dim squeezed by BlockSpec)
    std_ref   : (1,)             SMEM  minibatch-stddev scalar (the extra channel)
    w*/b*_ref : flat f32         SMEM  scale-folded weights / biases
    o_ref     : (1, H-1, W-1)    VMEM  conv_3 output at conv_2 stride 1
    xpad1_ref : (C+1, H+2, W+2)  VMEM  zero-padded conv_1 input (x ++ std plane)
    xpad2_ref : (C,   H+2, W+2)  VMEM  zero-padded conv_2 input (conv_1 output)
    """
    c, h, w = x_ref.shape
    c1_in = c + 1                               # + minibatch-stddev channel
    hf, wf = o_ref.shape[1], o_ref.shape[2]     # = h - 1, w - 1 (stride-1 conv_2 size)
    f32 = jnp.float32

    # --- Stage 0: padded conv_1 input. The constant stddev channel is built
    # in-kernel (never materialized in HBM). Border stays 0 == zero padding.
    xpad1_ref[...] = jnp.zeros(xpad1_ref.shape, f32)
    for ci in range(c):
        xpad1_ref[ci, 1:h + 1, 1:w + 1] = x_ref[ci]
    xpad1_ref[c, 1:h + 1, 1:w + 1] = jnp.full((h, w), std_ref[0], f32)

    # --- Stage 1: conv_1 (3x3, pad 1) + LeakyReLU(0.2), unrolled VPU FMAs.
    # Loop order: window plane outermost -> each VMEM load feeds C FMAs, and only
    # the C accumulator planes stay live in vregs (no spills, fewer loads).
    acc1 = [jnp.full((h, w), b1_ref[co], f32) for co in range(c)]
    for ci in range(c1_in):
        for kh in range(3):
            for kw in range(3):
                win = xpad1_ref[ci, kh:kh + h, kw:kw + w]
                for co in range(c):
                    widx = ((co * c1_in + ci) * 3 + kh) * 3 + kw
                    acc1[co] = acc1[co] + w1_ref[widx] * win

    xpad2_ref[...] = jnp.zeros(xpad2_ref.shape, f32)
    for co in range(c):
        a = acc1[co]
        a = jnp.maximum(a, 0.2 * a)                      # LeakyReLU(0.2)
        xpad2_ref[co, 1:h + 1, 1:w + 1] = a              # padded conv_2 input

    # --- Stage 2+3: conv_2 (4x4, pad 1) at stride 1 + LeakyReLU, with the 1x1
    # conv_3 folded in (one FMA per channel). Stride-2 subsample happens in the
    # wrapper on the tiny single-channel result.
    # TODO(synk): if lane/sublane-strided ref reads become reliably lowerable,
    # compute conv_2 only at the stride-2 output positions to cut ~4x FMA work.
    acc2 = [jnp.full((hf, wf), b2_ref[co], f32) for co in range(c)]
    for ci in range(c):
        for kh in range(4):
            for kw in range(4):
                win = xpad2_ref[ci, kh:kh + hf, kw:kw + wf]
                for co in range(c):
                    widx = ((co * c + ci) * 4 + kh) * 4 + kw
                    acc2[co] = acc2[co] + w2_ref[widx] * win

    y3 = jnp.full((hf, wf), b3_ref[0], f32)
    for co in range(c):
        a = acc2[co]
        a = jnp.maximum(a, 0.2 * a)                      # LeakyReLU(0.2)
        y3 = y3 + w3_ref[co] * a                         # conv_3 (1x1)

    o_ref[...] = y3[None, :, :].astype(o_ref.dtype)


def dis_final_block_forward(x, w1, b1, w2, b2, w3, b3, *, alpha=1e-8):
    """Forward pass of DisFinalBlock (use_eql=True) on an NCHW input."""
    n, c, h, w = x.shape
    assert w1.shape == (c, c + 1, 3, 3) and w2.shape == (c, c, 4, 4)
    assert w3.shape == (1, c, 1, 1)
    f32 = jnp.float32
    x = x.astype(f32)

    # Fold the equalized-lr scale into the weights once, at trace time.
    s1 = math.sqrt(2.0) / math.sqrt(3 * 3 * (c + 1))
    s2 = math.sqrt(2.0) / math.sqrt(4 * 4 * c)
    s3 = math.sqrt(2.0) / math.sqrt(1 * 1 * c)
    w1f = (w1.astype(f32) * s1).reshape(-1)
    w2f = (w2.astype(f32) * s2).reshape(-1)
    w3f = (w3.astype(f32) * s3).reshape(-1)
    b1f = b1.astype(f32).reshape(-1)
    b2f = b2.astype(f32).reshape(-1)
    b3f = b3.astype(f32).reshape(-1)

    # Kernel 1: minibatch-stddev scalar (whole tensor is one small VMEM block).
    std = pl.pallas_call(
        functools.partial(_mbstd_kernel, alpha=alpha),
        out_shape=jax.ShapeDtypeStruct((1,), f32),
        in_specs=[pl.BlockSpec(memory_space=pltpu.MemorySpace.VMEM)],
        out_specs=pl.BlockSpec(memory_space=pltpu.MemorySpace.SMEM),
    )(x.reshape(n, c * h * w))

    # Kernel 2: fused conv_1 -> LReLU -> conv_2(stride-1 form) -> LReLU -> conv_3.
    smem = pl.BlockSpec(memory_space=pltpu.MemorySpace.SMEM)
    hf, wf = h - 1, w - 1
    y_full = pl.pallas_call(
        _dis_final_kernel,
        out_shape=jax.ShapeDtypeStruct((n, 1, hf, wf), f32),
        grid=(n,),
        in_specs=[
            pl.BlockSpec((None, c, h, w), lambda i: (i, 0, 0, 0)),
            smem, smem, smem, smem, smem, smem, smem,
        ],
        out_specs=pl.BlockSpec((None, 1, hf, wf), lambda i: (i, 0, 0, 0)),
        scratch_shapes=[
            pltpu.VMEM((c + 1, h + 2, w + 2), f32),
            pltpu.VMEM((c, h + 2, w + 2), f32),
        ],
        compiler_params=pltpu.CompilerParams(
            dimension_semantics=("parallel",),
            vmem_limit_bytes=32 * 1024 * 1024,
        ),
    )(x, std, w1f, b1f, w2f, b2f, w3f, b3f)

    # conv_2 has stride 2: keep every other row/col of the (tiny, 1-channel)
    # stride-1 result.  TODO(synk): for large channel counts (>=128) switch the
    # unrolled VPU-FMA taps to an MXU matmul formulation instead.
    return y_full[:, :, ::2, ::2]


def _reference_forward(x, w1, b1, w2, b2, w3, b3, *, alpha=1e-8):
    """Pure-JAX reference of the PyTorch DisFinalBlock forward."""
    n, c, h, w = x.shape
    mu = jnp.mean(x, axis=0, keepdims=True)
    std = jnp.mean(jnp.sqrt(jnp.mean((x - mu) ** 2, axis=0) + alpha))
    y = jnp.concatenate([x, jnp.full((n, 1, h, w), std, x.dtype)], axis=1)

    def eq_conv(z, wt, bs, stride, pad):
        fan_in = wt.shape[1] * wt.shape[2] * wt.shape[3]
        scale = math.sqrt(2.0) / math.sqrt(fan_in)
        out = jax.lax.conv_general_dilated(
            z, wt * scale, (stride, stride), [(pad, pad), (pad, pad)],
            dimension_numbers=("NCHW", "OIHW", "NCHW"),
            precision=jax.lax.Precision.HIGHEST)
        return out + bs.reshape(1, -1, 1, 1)

    lrelu = lambda t: jnp.maximum(t, 0.2 * t)
    y = lrelu(eq_conv(y, w1, b1, 1, 1))
    y = lrelu(eq_conv(y, w2, b2, 2, 1))
    return eq_conv(y, w3, b3, 1, 0)


if __name__ == "__main__":
    key = jax.random.PRNGKey(0)
    kx, k1, k2, k3 = jax.random.split(key, 4)

    N, C, H, W = 2, 4, 16, 16
    x = jax.random.normal(kx, (N, C, H, W), dtype=jnp.float32)
    # torch.nn.init.normal_ -> std 1; biases are initialized to 0 in the module.
    w1 = jax.random.normal(k1, (C, C + 1, 3, 3), dtype=jnp.float32)
    b1 = jnp.zeros((C,), jnp.float32)
    w2 = jax.random.normal(k2, (C, C, 4, 4), dtype=jnp.float32)
    b2 = jnp.zeros((C,), jnp.float32)
    w3 = jax.random.normal(k3, (1, C, 1, 1), dtype=jnp.float32)
    b3 = jnp.zeros((1,), jnp.float32)

    y = dis_final_block_forward(x, w1, b1, w2, b2, w3, b3)
    y = jax.block_until_ready(y)

    y_ref = _reference_forward(x, w1, b1, w2, b2, w3, b3)
    assert y.shape == (N, 1, H // 2, W // 2), y.shape
    max_err = float(jnp.max(jnp.abs(y - y_ref)))
    assert jnp.allclose(y, y_ref, atol=2e-4, rtol=2e-4), max_err

    print("KERNEL_OK")
</pallas_src>

<mosaic_0001>
module attributes {stable_mosaic.version = 11 : i64} {
  func.func @_mbstd_kernel(%arg0: memref<2x1024xf32, #tpu.memory_space<vmem>>, %arg1: memref<1xf32, #tpu.memory_space<smem>>) attributes {dimension_semantics = [], scalar_prefetch = 0 : i64, scratch_operands = 0 : i64, tpu.core_type = #tpu.core_type<tc>} {
    %c0 = arith.constant 0 : index
    %c0_0 = arith.constant 0 : index
    %0 = vector.load %arg0[%c0, %c0_0] : memref<2x1024xf32, #tpu.memory_space<vmem>>, vector<1x1024xf32>
    %c1 = arith.constant 1 : index
    %c0_1 = arith.constant 0 : index
    %1 = vector.load %arg0[%c1, %c0_1] : memref<2x1024xf32, #tpu.memory_space<vmem>>, vector<1x1024xf32>
    %2 = arith.addf %0, %1 : vector<1x1024xf32>
    %cst = arith.constant 5.000000e-01 : f32
    %3 = vector.broadcast %cst : f32 to vector<1x1024xf32>
    %4 = arith.mulf %2, %3 : vector<1x1024xf32>
    %5 = arith.subf %0, %4 : vector<1x1024xf32>
    %6 = arith.subf %0, %4 : vector<1x1024xf32>
    %7 = arith.mulf %5, %6 : vector<1x1024xf32>
    %8 = arith.subf %1, %4 : vector<1x1024xf32>
    %9 = arith.subf %1, %4 : vector<1x1024xf32>
    %10 = arith.mulf %8, %9 : vector<1x1024xf32>
    %11 = arith.addf %7, %10 : vector<1x1024xf32>
    %cst_2 = arith.constant 5.000000e-01 : f32
    %12 = vector.broadcast %cst_2 : f32 to vector<1x1024xf32>
    %13 = arith.mulf %11, %12 : vector<1x1024xf32>
    %cst_3 = arith.constant 9.99999993E-9 : f32
    %14 = vector.broadcast %cst_3 : f32 to vector<1x1024xf32>
    %15 = arith.addf %13, %14 : vector<1x1024xf32>
    %16 = math.sqrt %15 : vector<1x1024xf32>
    %17 = vector.shape_cast %16 : vector<1x1024xf32> to vector<1x1x1024xf32>
    %cst_4 = arith.constant dense<0.000000e+00> : vector<1xf32>
    %18 = vector.multi_reduction <add>, %17, %cst_4 [1, 2] : vector<1x1x1024xf32> to vector<1xf32>
    %19 = vector.shape_cast %18 : vector<1xf32> to vector<1x1x1xf32>
    %20 = vector.extract %19[0, 0, 0] : f32 from vector<1x1x1xf32>
    %cst_5 = arith.constant 1.024000e+03 : f32
    %21 = arith.divf %20, %cst_5 : f32
    %c0_6 = arith.constant 0 : index
    %22 = memref.load %arg1[%c0_6] : memref<1xf32, #tpu.memory_space<smem>>
    memref.store %21, %arg1[%c0_6] : memref<1xf32, #tpu.memory_space<smem>>
    return
  }
}

</mosaic_0001>

<llo_original>
// kernel: tpu_custom_call.1
$region0: #{tpu_custom_call.1}
  #allocation0 [shape = 'u32[]', space=smem, size = 0x4, offset = 0x4, fixed_abs, tag = 'smem constant byte address 0x4 - core index']
  #allocation1 [shape = 'u32[144,128]{1,0:T(1,128)}', space=vmem, size = 0x12000, scoped, tag = 'internal scratch']
  %s0 = inlined_call_operand.hbm [shape: f32[2,1024], index: 0, kind: input, shape index: {}]
  %s1 = inlined_call_operand.hbm [shape: f32[1], index: 1, kind: output, shape index: {}]
  %s2 = sld [smem:[#allocation0]]
  $region18: #{tpu_custom_call.1} parent=0
    _
  %s4 = ssub.s32 1, %s2
  %s5 = scalar_select 0, %s4, %s2
  $region1: #{tpu_custom_call.1} parent=0
    #allocation2 [shape = 'u8[8192]{0}', space=vmem, size = 0x2000, scoped, tag = 'input window, operand 0, single buffered']
    #allocation3 [shape = 's32[1]{0}', space=sflag, size = 0x4, scoped, tag = 'scoped memory for tpu_custom_call.1']
    #allocation4 [shape = 's32[1]{0}', space=sflag, size = 0x4, scoped, tag = 'scoped memory for tpu_custom_call.1']
    #allocation5 [shape = 'u8[512]{0}', space=smem, size = 0x200, scoped, tag = 'output window, operand 0, single buffered']
    %6 = vsyncpa [#allocation3], 0
    %7 = vsyncpa [#allocation4], 0
    // Predicated region
    $region2: #{tpu_custom_call.1} parent=1 // pred_check
      _
    $region3: #{tpu_custom_call.1} parent=1 // pred_check_branch
      %9 = sbr.rel (0) target = $region5
    $region4: #{tpu_custom_call.1} parent=1 // pred_region
      %s11 = ssub.s32 256, 256
      %12 = vsyncadd [#allocation3], %s11
      %s14 = sshll.u32 [#allocation2], 4
      %s15 = int_to_ptr.vmem [resolvable:$true] %s14
      %17 = dma.hbm_to_vmem [thread:$0]  %s0, 256, %s15, [#allocation3]
    $region5: #{tpu_custom_call.1} parent=1 // pred_fallthru
      _
    // Predicated region
    $region6: #{tpu_custom_call.1} parent=1 // pred_check
      _
    $region7: #{tpu_custom_call.1} parent=1 // pred_check_branch
      %19 = sbr.rel (0) target = $region9
    $region8: #{tpu_custom_call.1} parent=1 // pred_region
      %20 = dma.done [#allocation3], 256
    $region9: #{tpu_custom_call.1} parent=1 // pred_fallthru
      _
    %v21 = vld [vmem:[#allocation2] ss:$2 sm:$0xff]
    %s22 = scalar_lea.vmem [#allocation2], 1
    %v23 = vld [vmem:[%s22] ss:$2 sm:$0xff]
    %v24 = vadd.f32 %v21, %v23
    %v25 = vmul.f32 %v24, 0.5
    %v26 = vsub.f32 %v21, %v25
    %v27 = vmul.f32 %v26, %v26
    %v28 = vsub.f32 %v23, %v25
    %v29 = vmul.f32 %v28, %v28
    %v30 = vadd.f32 %v27, %v29
    %v31 = vmul.f32 %v30, 0.5
    %v32 = vadd.f32 %v31, 1e-08
    %v33 = vrsqrt.pop %v32
    %v34 = vmul.f32 %v32, %v33
    %vm35 = vcmp.eq.f32.partialorder %v32, inf
    %v36 = vsel %vm35, %v32, %v34
    %vm37 = vcmp.eq.f32.partialorder %v32, 0.0
    %v38 = vand.u32 %v32, 2147483648
    %v39 = vsel %vm37, %v38, %v36
    %v41 = vlaneseq
    %v42 = vshrl.u32 %v41, 7
    %v43 = vsub.s32 0, %v42
    %v44 = vrot.slane %v39, %v43
    %v45 = vlaneseq
    %v46 = vshrl.u32 %v45, 7
    %v47 = vsub.s32 1, %v46
    %v48 = vrot.slane %v39, %v47
    %v49 = vlaneseq
    %v50 = vshrl.u32 %v49, 7
    %v51 = vsub.s32 2, %v50
    %v52 = vrot.slane %v39, %v51
    %v53 = vlaneseq
    %v54 = vshrl.u32 %v53, 7
    %v55 = vsub.s32 3, %v54
    %v56 = vrot.slane %v39, %v55
    %v57 = vlaneseq
    %v58 = vshrl.u32 %v57, 7
    %v59 = vsub.s32 4, %v58
    %v60 = vrot.slane %v39, %v59
    %v61 = vlaneseq
    %v62 = vshrl.u32 %v61, 7
    %v63 = vsub.s32 5, %v62
    %v64 = vrot.slane %v39, %v63
    %v65 = vlaneseq
    %v66 = vshrl.u32 %v65, 7
    %v67 = vsub.s32 6, %v66
    %v68 = vrot.slane %v39, %v67
    %v69 = vlaneseq
    %v70 = vshrl.u32 %v69, 7
    %v71 = vsub.s32 7, %v70
    %v72 = vrot.slane %v39, %v71
    %vm81 = vcmask 1040384
    %v82 = vsel %vm81, %v44, 0.0
    %v83 = vsel %vm81, %v48, 0.0
    %v84 = vadd.f32 %v82, %v83
    %v85 = vsel %vm81, %v52, 0.0
    %v86 = vadd.f32 %v84, %v85
    %v87 = vsel %vm81, %v56, 0.0
    %v88 = vadd.f32 %v86, %v87
    %v89 = vsel %vm81, %v60, 0.0
    %v90 = vadd.f32 %v88, %v89
    %v91 = vsel %vm81, %v64, 0.0
    %v92 = vadd.f32 %v90, %v91
    %v93 = vsel %vm81, %v68, 0.0
    %v94 = vadd.f32 %v92, %v93
    %v95 = vsel %vm81, %v72, 0.0
    %v96 = vadd.f32 %v94, %v95
    %97 = vadd.xlane.f32.xlu0 %v96
    %v98 = vpop.xlane.xlu0 %97
    %v99 = vrot.slane %v98, 4
    %v100 = vadd.f32 %v98, %v99
    %v101 = vrot.slane %v100, 2
    %v102 = vadd.f32 %v100, %v101
    %v103 = vrot.slane %v102, 1
    %v104 = vadd.f32 %v102, %v103
    %s105 = vtos %v104
    %v106 = vrcp.pop 1024.0
    %s107 = vtos %v106
    %s108 = smul.f32 %s105, %s107
    %s109 = scalar_lea.smem [#allocation5], 0
    %110 = sst [smem:[%s109]] %s108
    // Predicated region
    $region10: #{tpu_custom_call.1} parent=1 // pred_check
      _
    $region11: #{tpu_custom_call.1} parent=1 // pred_check_branch
      %112 = sbr.rel (0) target = $region13
    $region12: #{tpu_custom_call.1} parent=1 // pred_region
      %s114 = ssub.s32 16, 16
      %115 = vsyncadd [#allocation4], %s114
      %118 = dma.smem_to_hbm [#allocation5], 16, %s1, [#allocation4]
    $region13: #{tpu_custom_call.1} parent=1 // pred_fallthru
      _
    // Predicated region
    $region14: #{tpu_custom_call.1} parent=1 // pred_check
      _
    $region15: #{tpu_custom_call.1} parent=1 // pred_check_branch
      %120 = sbr.rel (0) target = $region17
    $region16: #{tpu_custom_call.1} parent=1 // pred_region
      %121 = dma.done [#allocation4], 16
    $region17: #{tpu_custom_call.1} parent=1 // pred_fallthru
      _
    %122 = sfence
    %123 = vsyncpa [#allocation3], 1
    %124 = vsyncpa [#allocation4], 1

</llo_original>
